<compile_context>
chip_gen: v5e
topology: v5e:2x2
jax: 0.10.0
libtpu: 0.0.40
codegen_flags: <defaults>
</compile_context>

<pallas_src>
import jax
import jax.numpy as jnp
from jax import lax
from jax.experimental import pallas as pl
from jax.experimental.pallas import tpu as pltpu

EPS = 1e-6


def _layernorm_kernel(x_ref, g_ref, b_ref, o_ref):
    # x_ref: (R, C) full array; g_ref/b_ref: (1, C) float32.
    x = x_ref[...].astype(jnp.float32)
    inv_c = jnp.float32(1.0 / x.shape[-1])  # trace-time constant (1/384)

    # Two-pass statistics (matches torch.nn.LayerNorm numerics).
    mean = jnp.sum(x, axis=-1, keepdims=True) * inv_c
    xc = x - mean
    var = jnp.sum(xc * xc, axis=-1, keepdims=True) * inv_c
    inv = lax.rsqrt(var + EPS)

    g = g_ref[...]  # (1, C) f32
    b = b_ref[...]  # (1, C) f32

    o_ref[...] = (xc * (inv * g) + b).astype(o_ref.dtype)


def layernorm_pallas(x, gamma, beta):
    """x: (..., C); gamma, beta: (C,). LayerNorm over the last axis."""
    orig_shape = x.shape
    C = orig_shape[-1]
    R = 1
    for d in orig_shape[:-1]:
        R *= d

    x2 = x.reshape(R, C)
    g2 = gamma.reshape(1, C).astype(jnp.float32)
    b2 = beta.reshape(1, C).astype(jnp.float32)

    out = pl.pallas_call(
        _layernorm_kernel,
        out_shape=jax.ShapeDtypeStruct((R, C), x.dtype),
        in_specs=[
            pl.BlockSpec(memory_space=pltpu.MemorySpace.VMEM),  # full (R, C)
            pl.BlockSpec(memory_space=pltpu.MemorySpace.VMEM),  # full (1, C)
            pl.BlockSpec(memory_space=pltpu.MemorySpace.VMEM),  # full (1, C)
        ],
        out_specs=pl.BlockSpec(memory_space=pltpu.MemorySpace.VMEM),
    )(x2, g2, b2)

    return out.reshape(orig_shape)


if __name__ == "__main__":
    key = jax.random.PRNGKey(0)
    kx, kg, kb = jax.random.split(key, 3)

    # Matches the module's input shape: [1, 14, 14, 384]
    x = jax.random.normal(kx, (1, 14, 14, 384), dtype=jnp.float32)
    # Exercise the elementwise_affine path with deterministic non-trivial params.
    gamma = 1.0 + 0.1 * jax.random.normal(kg, (384,), dtype=jnp.float32)
    beta = 0.1 * jax.random.normal(kb, (384,), dtype=jnp.float32)

    y = layernorm_pallas(x, gamma, beta)
    jax.block_until_ready(y)

    # Pure-JAX reference (matches torch.nn.LayerNorm semantics).
    mean = jnp.mean(x, axis=-1, keepdims=True)
    var = jnp.mean((x - mean) ** 2, axis=-1, keepdims=True)
    ref = (x - mean) / jnp.sqrt(var + EPS) * gamma + beta
    assert jnp.allclose(y, ref, atol=1e-4, rtol=1e-4), "mismatch vs reference"

    print("KERNEL_OK")
</pallas_src>

<mosaic_0001>
module attributes {stable_mosaic.version = 11 : i64} {
  func.func @_layernorm_kernel(%arg0: memref<196x384xf32, #tpu.memory_space<vmem>>, %arg1: memref<1x384xf32, #tpu.memory_space<vmem>>, %arg2: memref<1x384xf32, #tpu.memory_space<vmem>>, %arg3: memref<196x384xf32, #tpu.memory_space<vmem>>) attributes {dimension_semantics = [], scalar_prefetch = 0 : i64, scratch_operands = 0 : i64, tpu.core_type = #tpu.core_type<tc>} {
    %c0 = arith.constant 0 : index
    %c0_0 = arith.constant 0 : index
    %0 = vector.load %arg0[%c0, %c0_0] : memref<196x384xf32, #tpu.memory_space<vmem>>, vector<196x384xf32>
    %cst = arith.constant dense<0.000000e+00> : vector<196xf32>
    %1 = vector.multi_reduction <add>, %0, %cst [1] : vector<196x384xf32> to vector<196xf32>
    %2 = vector.shape_cast %1 : vector<196xf32> to vector<196x1xf32>
    %cst_1 = arith.constant 0.00260416674 : f32
    %3 = vector.broadcast %cst_1 : f32 to vector<196x1xf32>
    %4 = arith.mulf %2, %3 : vector<196x1xf32>
    %5 = vector.broadcast %4 : vector<196x1xf32> to vector<196x384xf32>
    %6 = arith.subf %0, %5 : vector<196x384xf32>
    %7 = arith.mulf %6, %6 : vector<196x384xf32>
    %cst_2 = arith.constant dense<0.000000e+00> : vector<196xf32>
    %8 = vector.multi_reduction <add>, %7, %cst_2 [1] : vector<196x384xf32> to vector<196xf32>
    %9 = vector.shape_cast %8 : vector<196xf32> to vector<196x1xf32>
    %cst_3 = arith.constant 0.00260416674 : f32
    %10 = vector.broadcast %cst_3 : f32 to vector<196x1xf32>
    %11 = arith.mulf %9, %10 : vector<196x1xf32>
    %cst_4 = arith.constant 9.99999997E-7 : f32
    %12 = vector.broadcast %cst_4 : f32 to vector<196x1xf32>
    %13 = arith.addf %11, %12 : vector<196x1xf32>
    %14 = math.rsqrt %13 : vector<196x1xf32>
    %c0_5 = arith.constant 0 : index
    %c0_6 = arith.constant 0 : index
    %15 = vector.load %arg1[%c0_5, %c0_6] : memref<1x384xf32, #tpu.memory_space<vmem>>, vector<1x384xf32>
    %c0_7 = arith.constant 0 : index
    %c0_8 = arith.constant 0 : index
    %16 = vector.load %arg2[%c0_7, %c0_8] : memref<1x384xf32, #tpu.memory_space<vmem>>, vector<1x384xf32>
    %17 = vector.broadcast %14 : vector<196x1xf32> to vector<196x384xf32>
    %18 = vector.broadcast %15 : vector<1x384xf32> to vector<196x384xf32>
    %19 = arith.mulf %17, %18 : vector<196x384xf32>
    %20 = arith.mulf %6, %19 : vector<196x384xf32>
    %21 = vector.broadcast %16 : vector<1x384xf32> to vector<196x384xf32>
    %22 = arith.addf %20, %21 : vector<196x384xf32>
    %c0_9 = arith.constant 0 : index
    %c0_10 = arith.constant 0 : index
    %23 = vector.load %arg3[%c0_9, %c0_10] : memref<196x384xf32, #tpu.memory_space<vmem>>, vector<196x384xf32>
    tpu.vector_store %arg3[%c0_9, %c0_10], %22 {strides = array<i32>} : memref<196x384xf32, #tpu.memory_space<vmem>>, vector<196x384xf32>,
    return
  }
}

</mosaic_0001>

<llo_original>
// kernel: tpu_custom_call.1
$region0: #{tpu_custom_call.1}
  #allocation0 [shape = 'u32[]', space=smem, size = 0x4, offset = 0x4, fixed_abs, tag = 'smem constant byte address 0x4 - core index']
  #allocation1 [shape = 'u32[72,128]{1,0:T(1,128)}', space=vmem, size = 0x9000, scoped, tag = 'internal scratch']
  %s0 = inlined_call_operand.hbm [shape: f32[196,384], index: 0, kind: input, shape index: {}]
  %s1 = inlined_call_operand.hbm [shape: f32[1,384], index: 1, kind: input, shape index: {}]
  %s2 = inlined_call_operand.hbm [shape: f32[1,384], index: 2, kind: input, shape index: {}]
  %s3 = inlined_call_operand.hbm [shape: f32[196,384], index: 3, kind: output, shape index: {}]
  %s4 = sld [smem:[#allocation0]]
  $region34: #{tpu_custom_call.1} parent=0
    _
  %s6 = ssub.s32 1, %s4
  %s7 = scalar_select 0, %s6, %s4
  $region1: #{tpu_custom_call.1} parent=0
    #allocation2 [shape = 'u8[307200]{0}', space=vmem, size = 0x4b000, scoped, tag = 'input window, operand 0, single buffered']
    #allocation3 [shape = 's32[1]{0}', space=sflag, size = 0x4, scoped, tag = 'scoped memory for tpu_custom_call.1']
    #allocation4 [shape = 's32[1]{0}', space=sflag, size = 0x4, scoped, tag = 'scoped memory for tpu_custom_call.1']
    #allocation5 [shape = 'u8[1536]{0}', space=vmem, size = 0x800, scoped, tag = 'input window, operand 1, single buffered']
    #allocation6 [shape = 's32[1]{0}', space=sflag, size = 0x4, scoped, tag = 'scoped memory for tpu_custom_call.1']
    #allocation7 [shape = 'u8[1536]{0}', space=vmem, size = 0x800, scoped, tag = 'input window, operand 2, single buffered']
    #allocation8 [shape = 'u8[307200]{0}', space=vmem, size = 0x4b000, scoped, tag = 'output window, operand 0, single buffered']
    %8 = vsyncpa [#allocation3], 0
    %9 = vsyncpa [#allocation6], 0
    %10 = vsyncpa [#allocation4], 0
    // Predicated region
    $region2: #{tpu_custom_call.1} parent=1 // pred_check
      _
    $region3: #{tpu_custom_call.1} parent=1 // pred_check_branch
      %12 = sbr.rel (0) target = $region5
    $region4: #{tpu_custom_call.1} parent=1 // pred_region
      %14 = vsyncadd [#allocation3], 0
      %s15 = sshll.u32 %s0, 4
      %s16 = int_to_ptr.hbm [resolvable:$true] %s15
      %s17 = sshll.u32 [#allocation2], 4
      %s18 = int_to_ptr.vmem [resolvable:$true] %s17
      %23 = dma.hbm_to_vmem [thread:$0]  %s16, 9600, %s18, [#allocation3], 384, 384, 24
    $region5: #{tpu_custom_call.1} parent=1 // pred_fallthru
      _
    // Predicated region
    $region6: #{tpu_custom_call.1} parent=1 // pred_check
      _
    $region7: #{tpu_custom_call.1} parent=1 // pred_check_branch
      %25 = sbr.rel (0) target = $region9
    $region8: #{tpu_custom_call.1} parent=1 // pred_region
      %27 = vsyncadd [#allocation6], 0
      %s29 = sshll.u32 %s1, 4
      %s30 = int_to_ptr.hbm [resolvable:$true] %s29
      %s31 = sshll.u32 [#allocation5], 4
      %s32 = int_to_ptr.vmem [resolvable:$true] %s31
      %34 = dma.hbm_to_vmem [thread:$0]  %s30, 48, %s32, [#allocation6]
    $region9: #{tpu_custom_call.1} parent=1 // pred_fallthru
      _
    // Predicated region
    $region10: #{tpu_custom_call.1} parent=1 // pred_check
      _
    $region11: #{tpu_custom_call.1} parent=1 // pred_check_branch
      %36 = sbr.rel (0) target = $region13
    $region12: #{tpu_custom_call.1} parent=1 // pred_region
      %38 = vsyncadd [#allocation6], 0
      %s40 = sshll.u32 %s2, 4
      %s41 = int_to_ptr.hbm [resolvable:$true] %s40
      %s42 = sshll.u32 [#allocation7], 4
      %s43 = int_to_ptr.vmem [resolvable:$true] %s42
      %45 = dma.hbm_to_vmem [thread:$0]  %s41, 48, %s43, [#allocation6]
    $region13: #{tpu_custom_call.1} parent=1 // pred_fallthru
      _
    // Predicated region
    $region14: #{tpu_custom_call.1} parent=1 // pred_check
      _
    $region15: #{tpu_custom_call.1} parent=1 // pred_check_branch
      %47 = sbr.rel (0) target = $region17
    $region16: #{tpu_custom_call.1} parent=1 // pred_region
      %49 = dma.done [#allocation3], 9600
    $region17: #{tpu_custom_call.1} parent=1 // pred_fallthru
      _
    // Predicated region
    $region18: #{tpu_custom_call.1} parent=1 // pred_check
      _
    $region19: #{tpu_custom_call.1} parent=1 // pred_check_branch
      %51 = sbr.rel (0) target = $region21
    $region20: #{tpu_custom_call.1} parent=1 // pred_region
      %53 = dma.done [#allocation6], 48
    $region21: #{tpu_custom_call.1} parent=1 // pred_fallthru
      _
    // Predicated region
    $region22: #{tpu_custom_call.1} parent=1 // pred_check
      _
    $region23: #{tpu_custom_call.1} parent=1 // pred_check_branch
      %55 = sbr.rel (0) target = $region25
    $region24: #{tpu_custom_call.1} parent=1 // pred_region
      %57 = dma.done [#allocation6], 48
    $region25: #{tpu_custom_call.1} parent=1 // pred_fallthru
      _
    %v58 = vld [vmem:[#allocation2] sm:$0xff]
    %v59 = vld [vmem:[#allocation2 + $0x8] sm:$0xff]
    %v60 = vld [vmem:[#allocation2 + $0x10] sm:$0xff]
    %v61 = vld [vmem:[#allocation2 + $0x18] sm:$0xff]
    %v62 = vld [vmem:[#allocation2 + $0x20] sm:$0xff]
    %v63 = vld [vmem:[#allocation2 + $0x28] sm:$0xff]
    %v64 = vld [vmem:[#allocation2 + $0x30] sm:$0xff]
    %v65 = vld [vmem:[#allocation2 + $0x38] sm:$0xff]
    %v66 = vld [vmem:[#allocation2 + $0x40] sm:$0xff]
    %v67 = vld [vmem:[#allocation2 + $0x48] sm:$0xff]
    %v68 = vld [vmem:[#allocation2 + $0x50] sm:$0xff]
    %v69 = vld [vmem:[#allocation2 + $0x58] sm:$0xff]
    %v70 = vld [vmem:[#allocation2 + $0x60] sm:$0xff]
    %v71 = vld [vmem:[#allocation2 + $0x68] sm:$0xff]
    %v72 = vld [vmem:[#allocation2 + $0x70] sm:$0xff]
    %v73 = vld [vmem:[#allocation2 + $0x78] sm:$0xff]
    %v74 = vld [vmem:[#allocation2 + $0x80] sm:$0xff]
    %v75 = vld [vmem:[#allocation2 + $0x88] sm:$0xff]
    %v76 = vld [vmem:[#allocation2 + $0x90] sm:$0xff]
    %v77 = vld [vmem:[#allocation2 + $0x98] sm:$0xff]
    %v78 = vld [vmem:[#allocation2 + $0xa0] sm:$0xff]
    %v79 = vld [vmem:[#allocation2 + $0xa8] sm:$0xff]
    %v80 = vld [vmem:[#allocation2 + $0xb0] sm:$0xff]
    %v81 = vld [vmem:[#allocation2 + $0xb8] sm:$0xff]
    %v82 = vld [vmem:[#allocation2 + $0xc0] sm:$0xff]
    %v83 = vld [vmem:[#allocation2 + $0xc8] sm:$0xff]
    %v84 = vld [vmem:[#allocation2 + $0xd0] sm:$0xff]
    %v85 = vld [vmem:[#allocation2 + $0xd8] sm:$0xff]
    %v86 = vld [vmem:[#allocation2 + $0xe0] sm:$0xff]
    %v87 = vld [vmem:[#allocation2 + $0xe8] sm:$0xff]
    %v88 = vld [vmem:[#allocation2 + $0xf0] sm:$0xff]
    %v89 = vld [vmem:[#allocation2 + $0xf8] sm:$0xff]
    %v90 = vld [vmem:[#allocation2 + $0x100] sm:$0xff]
    %v91 = vld [vmem:[#allocation2 + $0x108] sm:$0xff]
    %v92 = vld [vmem:[#allocation2 + $0x110] sm:$0xff]
    %v93 = vld [vmem:[#allocation2 + $0x118] sm:$0xff]
    %v94 = vld [vmem:[#allocation2 + $0x120] sm:$0xff]
    %v95 = vld [vmem:[#allocation2 + $0x128] sm:$0xff]
    %v96 = vld [vmem:[#allocation2 + $0x130] sm:$0xff]
    %v97 = vld [vmem:[#allocation2 + $0x138] sm:$0xff]
    %v98 = vld [vmem:[#allocation2 + $0x140] sm:$0xff]
    %v99 = vld [vmem:[#allocation2 + $0x148] sm:$0xff]
    %v100 = vld [vmem:[#allocation2 + $0x150] sm:$0xff]
    %v101 = vld [vmem:[#allocation2 + $0x158] sm:$0xff]
    %v102 = vld [vmem:[#allocation2 + $0x160] sm:$0xff]
    %v103 = vld [vmem:[#allocation2 + $0x168] sm:$0xff]
    %v104 = vld [vmem:[#allocation2 + $0x170] sm:$0xff]
    %v105 = vld [vmem:[#allocation2 + $0x178] sm:$0xff]
    %v106 = vld [vmem:[#allocation2 + $0x180] sm:$0xff]
    %v107 = vld [vmem:[#allocation2 + $0x188] sm:$0xff]
    %v108 = vld [vmem:[#allocation2 + $0x190] sm:$0xff]
    %v109 = vld [vmem:[#allocation2 + $0x198] sm:$0xff]
    %v110 = vld [vmem:[#allocation2 + $0x1a0] sm:$0xff]
    %v111 = vld [vmem:[#allocation2 + $0x1a8] sm:$0xff]
    %v112 = vld [vmem:[#allocation2 + $0x1b0] sm:$0xff]
    %v113 = vld [vmem:[#allocation2 + $0x1b8] sm:$0xff]
    %v114 = vld [vmem:[#allocation2 + $0x1c0] sm:$0xff]
    %v115 = vld [vmem:[#allocation2 + $0x1c8] sm:$0xff]
    %v116 = vld [vmem:[#allocation2 + $0x1d0] sm:$0xff]
    %v117 = vld [vmem:[#allocation2 + $0x1d8] sm:$0xff]
    %v118 = vld [vmem:[#allocation2 + $0x1e0] sm:$0xff]
    %v119 = vld [vmem:[#allocation2 + $0x1e8] sm:$0xff]
    %v120 = vld [vmem:[#allocation2 + $0x1f0] sm:$0xff]
    %v121 = vld [vmem:[#allocation2 + $0x1f8] sm:$0xff]
    %v122 = vld [vmem:[#allocation2 + $0x200] sm:$0xff]
    %v123 = vld [vmem:[#allocation2 + $0x208] sm:$0xff]
    %v124 = vld [vmem:[#allocation2 + $0x210] sm:$0xff]
    %v125 = vld [vmem:[#allocation2 + $0x218] sm:$0xff]
    %v126 = vld [vmem:[#allocation2 + $0x220] sm:$0xff]
    %v127 = vld [vmem:[#allocation2 + $0x228] sm:$0xff]
    %v128 = vld [vmem:[#allocation2 + $0x230] sm:$0xff]
    %v129 = vld [vmem:[#allocation2 + $0x238] sm:$0xff]
    %v130 = vld [vmem:[#allocation2 + $0x240] sm:$0xf]
    %v131 = vld [vmem:[#allocation2 + $0x248] sm:$0xf]
    %v132 = vld [vmem:[#allocation2 + $0x250] sm:$0xf]
    %v133 = vadd.f32 %v58, %v59
    %v134 = vadd.f32 %v133, %v60
    %135 = vadd.xlane.f32.xlu0 %v134
    %v136 = vpop.xlane.xlu0 %135
    %v137 = vadd.f32 %v61, %v62
    %v138 = vadd.f32 %v137, %v63
    %139 = vadd.xlane.f32.xlu0 %v138
    %v140 = vpop.xlane.xlu0 %139
    %v141 = vadd.f32 %v64, %v65
    %v142 = vadd.f32 %v141, %v66
    %143 = vadd.xlane.f32.xlu0 %v142
    %v144 = vpop.xlane.xlu0 %143
    %v145 = vadd.f32 %v67, %v68
    %v146 = vadd.f32 %v145, %v69
    %147 = vadd.xlane.f32.xlu0 %v146
    %v148 = vpop.xlane.xlu0 %147
    %v149 = vadd.f32 %v70, %v71
    %v150 = vadd.f32 %v149, %v72
    %151 = vadd.xlane.f32.xlu0 %v150
    %v152 = vpop.xlane.xlu0 %151
    %v153 = vadd.f32 %v73, %v74
    %v154 = vadd.f32 %v153, %v75
    %155 = vadd.xlane.f32.xlu0 %v154
    %v156 = vpop.xlane.xlu0 %155
    %v157 = vadd.f32 %v76, %v77
    %v158 = vadd.f32 %v157, %v78
    %159 = vadd.xlane.f32.xlu0 %v158
    %v160 = vpop.xlane.xlu0 %159
    %v161 = vadd.f32 %v79, %v80
    %v162 = vadd.f32 %v161, %v81
    %163 = vadd.xlane.f32.xlu0 %v162
    %v164 = vpop.xlane.xlu0 %163
    %v165 = vadd.f32 %v82, %v83
    %v166 = vadd.f32 %v165, %v84
    %167 = vadd.xlane.f32.xlu0 %v166
    %v168 = vpop.xlane.xlu0 %167
    %v169 = vadd.f32 %v85, %v86
    %v170 = vadd.f32 %v169, %v87
    %171 = vadd.xlane.f32.xlu0 %v170
    %v172 = vpop.xlane.xlu0 %171
    %v173 = vadd.f32 %v88, %v89
    %v174 = vadd.f32 %v173, %v90
    %175 = vadd.xlane.f32.xlu0 %v174
    %v176 = vpop.xlane.xlu0 %175
    %v177 = vadd.f32 %v91, %v92
    %v178 = vadd.f32 %v177, %v93
    %179 = vadd.xlane.f32.xlu0 %v178
    %v180 = vpop.xlane.xlu0 %179
    %v181 = vadd.f32 %v94, %v95
    %v182 = vadd.f32 %v181, %v96
    %183 = vadd.xlane.f32.xlu0 %v182
    %v184 = vpop.xlane.xlu0 %183
    %v185 = vadd.f32 %v97, %v98
    %v186 = vadd.f32 %v185, %v99
    %187 = vadd.xlane.f32.xlu0 %v186
    %v188 = vpop.xlane.xlu0 %187
    %v189 = vadd.f32 %v100, %v101
    %v190 = vadd.f32 %v189, %v102
    %191 = vadd.xlane.f32.xlu0 %v190
    %v192 = vpop.xlane.xlu0 %191
    %v193 = vadd.f32 %v103, %v104
    %v194 = vadd.f32 %v193, %v105
    %195 = vadd.xlane.f32.xlu0 %v194
    %v196 = vpop.xlane.xlu0 %195
    %v197 = vadd.f32 %v106, %v107
    %v198 = vadd.f32 %v197, %v108
    %199 = vadd.xlane.f32.xlu0 %v198
    %v200 = vpop.xlane.xlu0 %199
    %v201 = vadd.f32 %v109, %v110
    %v202 = vadd.f32 %v201, %v111
    %203 = vadd.xlane.f32.xlu0 %v202
    %v204 = vpop.xlane.xlu0 %203
    %v205 = vadd.f32 %v112, %v113
    %v206 = vadd.f32 %v205, %v114
    %207 = vadd.xlane.f32.xlu0 %v206
    %v208 = vpop.xlane.xlu0 %207
    %v209 = vadd.f32 %v115, %v116
    %v210 = vadd.f32 %v209, %v117
    %211 = vadd.xlane.f32.xlu0 %v210
    %v212 = vpop.xlane.xlu0 %211
    %v213 = vadd.f32 %v118, %v119
    %v214 = vadd.f32 %v213, %v120
    %215 = vadd.xlane.f32.xlu0 %v214
    %v216 = vpop.xlane.xlu0 %215
    %v217 = vadd.f32 %v121, %v122
    %v218 = vadd.f32 %v217, %v123
    %219 = vadd.xlane.f32.xlu0 %v218
    %v220 = vpop.xlane.xlu0 %219
    %v221 = vadd.f32 %v124, %v125
    %v222 = vadd.f32 %v221, %v126
    %223 = vadd.xlane.f32.xlu0 %v222
    %v224 = vpop.xlane.xlu0 %223
    %v225 = vadd.f32 %v127, %v128
    %v226 = vadd.f32 %v225, %v129
    %227 = vadd.xlane.f32.xlu0 %v226
    %v228 = vpop.xlane.xlu0 %227
    %vm229 = vcmask 1043456
    %v230 = vsel %vm229, %v130, 0.0
    %v231 = vsel %vm229, %v131, 0.0
    %v232 = vadd.f32 %v230, %v231
    %v233 = vsel %vm229, %v132, 0.0
    %v234 = vadd.f32 %v232, %v233
    %235 = vadd.xlane.f32.xlu0 %v234
    %v236 = vpop.xlane.xlu0 %235
    %v237 = vmul.f32 %v136, 0.0026041667
    %v238 = vmul.f32 %v140, 0.0026041667
    %v239 = vmul.f32 %v144, 0.0026041667
    %v240 = vmul.f32 %v148, 0.0026041667
    %v241 = vmul.f32 %v152, 0.0026041667
    %v242 = vmul.f32 %v156, 0.0026041667
    %v243 = vmul.f32 %v160, 0.0026041667
    %v244 = vmul.f32 %v164, 0.0026041667
    %v245 = vmul.f32 %v168, 0.0026041667
    %v246 = vmul.f32 %v172, 0.0026041667
    %v247 = vmul.f32 %v176, 0.0026041667
    %v248 = vmul.f32 %v180, 0.0026041667
    %v249 = vmul.f32 %v184, 0.0026041667
    %v250 = vmul.f32 %v188, 0.0026041667
    %v251 = vmul.f32 %v192, 0.0026041667
    %v252 = vmul.f32 %v196, 0.0026041667
    %v253 = vmul.f32 %v200, 0.0026041667
    %v254 = vmul.f32 %v204, 0.0026041667
    %v255 = vmul.f32 %v208, 0.0026041667
    %v256 = vmul.f32 %v212, 0.0026041667
    %v257 = vmul.f32 %v216, 0.0026041667
    %v258 = vmul.f32 %v220, 0.0026041667
    %v259 = vmul.f32 %v224, 0.0026041667
    %v260 = vmul.f32 %v228, 0.0026041667
    %v261 = vmul.f32 %v236, 0.0026041667
    %v262 = vsub.f32 %v58, %v237
    %v263 = vsub.f32 %v59, %v237
    %v264 = vsub.f32 %v60, %v237
    %v265 = vsub.f32 %v61, %v238
    %v266 = vsub.f32 %v62, %v238
    %v267 = vsub.f32 %v63, %v238
    %v268 = vsub.f32 %v64, %v239
    %v269 = vsub.f32 %v65, %v239
    %v270 = vsub.f32 %v66, %v239
    %v271 = vsub.f32 %v67, %v240
    %v272 = vsub.f32 %v68, %v240
    %v273 = vsub.f32 %v69, %v240
    %v274 = vsub.f32 %v70, %v241
    %v275 = vsub.f32 %v71, %v241
    %v276 = vsub.f32 %v72, %v241
    %v277 = vsub.f32 %v73, %v242
    %v278 = vsub.f32 %v74, %v242
    %v279 = vsub.f32 %v75, %v242
    %v280 = vsub.f32 %v76, %v243
    %v281 = vsub.f32 %v77, %v243
    %v282 = vsub.f32 %v78, %v243
    %v283 = vsub.f32 %v79, %v244
    %v284 = vsub.f32 %v80, %v244
    %v285 = vsub.f32 %v81, %v244
    %v286 = vsub.f32 %v82, %v245
    %v287 = vsub.f32 %v83, %v245
    %v288 = vsub.f32 %v84, %v245
    %v289 = vsub.f32 %v85, %v246
    %v290 = vsub.f32 %v86, %v246
    %v291 = vsub.f32 %v87, %v246
    %v292 = vsub.f32 %v88, %v247
    %v293 = vsub.f32 %v89, %v247
    %v294 = vsub.f32 %v90, %v247
    %v295 = vsub.f32 %v91, %v248
    %v296 = vsub.f32 %v92, %v248
    %v297 = vsub.f32 %v93, %v248
    %v298 = vsub.f32 %v94, %v249
    %v299 = vsub.f32 %v95, %v249
    %v300 = vsub.f32 %v96, %v249
    %v301 = vsub.f32 %v97, %v250
    %v302 = vsub.f32 %v98, %v250
    %v303 = vsub.f32 %v99, %v250
    %v304 = vsub.f32 %v100, %v251
    %v305 = vsub.f32 %v101, %v251
    %v306 = vsub.f32 %v102, %v251
    %v307 = vsub.f32 %v103, %v252
    %v308 = vsub.f32 %v104, %v252
    %v309 = vsub.f32 %v105, %v252
    %v310 = vsub.f32 %v106, %v253
    %v311 = vsub.f32 %v107, %v253
    %v312 = vsub.f32 %v108, %v253
    %v313 = vsub.f32 %v109, %v254
    %v314 = vsub.f32 %v110, %v254
    %v315 = vsub.f32 %v111, %v254
    %v316 = vsub.f32 %v112, %v255
    %v317 = vsub.f32 %v113, %v255
    %v318 = vsub.f32 %v114, %v255
    %v319 = vsub.f32 %v115, %v256
    %v320 = vsub.f32 %v116, %v256
    %v321 = vsub.f32 %v117, %v256
    %v322 = vsub.f32 %v118, %v257
    %v323 = vsub.f32 %v119, %v257
    %v324 = vsub.f32 %v120, %v257
    %v325 = vsub.f32 %v121, %v258
    %v326 = vsub.f32 %v122, %v258
    %v327 = vsub.f32 %v123, %v258
    %v328 = vsub.f32 %v124, %v259
    %v329 = vsub.f32 %v125, %v259
    %v330 = vsub.f32 %v126, %v259
    %v331 = vsub.f32 %v127, %v260
    %v332 = vsub.f32 %v128, %v260
    %v333 = vsub.f32 %v129, %v260
    %v334 = vsub.f32 %v130, %v261
    %v335 = vsub.f32 %v131, %v261
    %v336 = vsub.f32 %v132, %v261
    %v337 = vmul.f32 %v262, %v262
    %v338 = vmul.f32 %v263, %v263
    %v339 = vmul.f32 %v264, %v264
    %v340 = vmul.f32 %v265, %v265
    %v341 = vmul.f32 %v266, %v266
    %v342 = vmul.f32 %v267, %v267
    %v343 = vmul.f32 %v268, %v268
    %v344 = vmul.f32 %v269, %v269
    %v345 = vmul.f32 %v270, %v270
    %v346 = vmul.f32 %v271, %v271
    %v347 = vmul.f32 %v272, %v272
    %v348 = vmul.f32 %v273, %v273
    %v349 = vmul.f32 %v274, %v274
    %v350 = vmul.f32 %v275, %v275
    %v351 = vmul.f32 %v276, %v276
    %v352 = vmul.f32 %v277, %v277
    %v353 = vmul.f32 %v278, %v278
    %v354 = vmul.f32 %v279, %v279
    %v355 = vmul.f32 %v280, %v280
    %v356 = vmul.f32 %v281, %v281
    %v357 = vmul.f32 %v282, %v282
    %v358 = vmul.f32 %v283, %v283
    %v359 = vmul.f32 %v284, %v284
    %v360 = vmul.f32 %v285, %v285
    %v361 = vmul.f32 %v286, %v286
    %v362 = vmul.f32 %v287, %v287
    %v363 = vmul.f32 %v288, %v288
    %v364 = vmul.f32 %v289, %v289
    %v365 = vmul.f32 %v290, %v290
    %v366 = vmul.f32 %v291, %v291
    %v367 = vmul.f32 %v292, %v292
    %v368 = vmul.f32 %v293, %v293
    %v369 = vmul.f32 %v294, %v294
    %v370 = vmul.f32 %v295, %v295
    %v371 = vmul.f32 %v296, %v296
    %v372 = vmul.f32 %v297, %v297
    %v373 = vmul.f32 %v298, %v298
    %v374 = vmul.f32 %v299, %v299
    %v375 = vmul.f32 %v300, %v300
    %v376 = vmul.f32 %v301, %v301
    %v377 = vmul.f32 %v302, %v302
    %v378 = vmul.f32 %v303, %v303
    %v379 = vmul.f32 %v304, %v304
    %v380 = vmul.f32 %v305, %v305
    %v381 = vmul.f32 %v306, %v306
    %v382 = vmul.f32 %v307, %v307
    %v383 = vmul.f32 %v308, %v308
    %v384 = vmul.f32 %v309, %v309
    %v385 = vmul.f32 %v310, %v310
    %v386 = vmul.f32 %v311, %v311
    %v387 = vmul.f32 %v312, %v312
    %v388 = vmul.f32 %v313, %v313
    %v389 = vmul.f32 %v314, %v314
    %v390 = vmul.f32 %v315, %v315
    %v391 = vmul.f32 %v316, %v316
    %v392 = vmul.f32 %v317, %v317
    %v393 = vmul.f32 %v318, %v318
    %v394 = vmul.f32 %v319, %v319
    %v395 = vmul.f32 %v320, %v320
    %v396 = vmul.f32 %v321, %v321
    %v397 = vmul.f32 %v322, %v322
    %v398 = vmul.f32 %v323, %v323
    %v399 = vmul.f32 %v324, %v324
    %v400 = vmul.f32 %v325, %v325
    %v401 = vmul.f32 %v326, %v326
    %v402 = vmul.f32 %v327, %v327
    %v403 = vmul.f32 %v328, %v328
    %v404 = vmul.f32 %v329, %v329
    %v405 = vmul.f32 %v330, %v330
    %v406 = vmul.f32 %v331, %v331
    %v407 = vmul.f32 %v332, %v332
    %v408 = vmul.f32 %v333, %v333
    %v409 = vmul.f32 %v334, %v334
    %v410 = vmul.f32 %v335, %v335
    %v411 = vmul.f32 %v336, %v336
    %v412 = vadd.f32 %v337, %v338
    %v413 = vadd.f32 %v412, %v339
    %414 = vadd.xlane.f32.xlu0 %v413
    %v415 = vpop.xlane.xlu0 %414
    %v416 = vadd.f32 %v340, %v341
    %v417 = vadd.f32 %v416, %v342
    %418 = vadd.xlane.f32.xlu0 %v417
    %v419 = vpop.xlane.xlu0 %418
    %v420 = vadd.f32 %v343, %v344
    %v421 = vadd.f32 %v420, %v345
    %422 = vadd.xlane.f32.xlu0 %v421
    %v423 = vpop.xlane.xlu0 %422
    %v424 = vadd.f32 %v346, %v347
    %v425 = vadd.f32 %v424, %v348
    %426 = vadd.xlane.f32.xlu0 %v425
    %v427 = vpop.xlane.xlu0 %426
    %v428 = vadd.f32 %v349, %v350
    %v429 = vadd.f32 %v428, %v351
    %430 = vadd.xlane.f32.xlu0 %v429
    %v431 = vpop.xlane.xlu0 %430
    %v432 = vadd.f32 %v352, %v353
    %v433 = vadd.f32 %v432, %v354
    %434 = vadd.xlane.f32.xlu0 %v433
    %v435 = vpop.xlane.xlu0 %434
    %v436 = vadd.f32 %v355, %v356
    %v437 = vadd.f32 %v436, %v357
    %438 = vadd.xlane.f32.xlu0 %v437
    %v439 = vpop.xlane.xlu0 %438
    %v440 = vadd.f32 %v358, %v359
    %v441 = vadd.f32 %v440, %v360
    %442 = vadd.xlane.f32.xlu0 %v441
    %v443 = vpop.xlane.xlu0 %442
    %v444 = vadd.f32 %v361, %v362
    %v445 = vadd.f32 %v444, %v363
    %446 = vadd.xlane.f32.xlu0 %v445
    %v447 = vpop.xlane.xlu0 %446
    %v448 = vadd.f32 %v364, %v365
    %v449 = vadd.f32 %v448, %v366
    %450 = vadd.xlane.f32.xlu0 %v449
    %v451 = vpop.xlane.xlu0 %450
    %v452 = vadd.f32 %v367, %v368
    %v453 = vadd.f32 %v452, %v369
    %454 = vadd.xlane.f32.xlu0 %v453
    %v455 = vpop.xlane.xlu0 %454
    %v456 = vadd.f32 %v370, %v371
    %v457 = vadd.f32 %v456, %v372
    %458 = vadd.xlane.f32.xlu0 %v457
    %v459 = vpop.xlane.xlu0 %458
    %v460 = vadd.f32 %v373, %v374
    %v461 = vadd.f32 %v460, %v375
    %462 = vadd.xlane.f32.xlu0 %v461
    %v463 = vpop.xlane.xlu0 %462
    %v464 = vadd.f32 %v376, %v377
    %v465 = vadd.f32 %v464, %v378
    %466 = vadd.xlane.f32.xlu0 %v465
    %v467 = vpop.xlane.xlu0 %466
    %v468 = vadd.f32 %v379, %v380
    %v469 = vadd.f32 %v468, %v381
    %470 = vadd.xlane.f32.xlu0 %v469
    %v471 = vpop.xlane.xlu0 %470
    %v472 = vadd.f32 %v382, %v383
    %v473 = vadd.f32 %v472, %v384
    %474 = vadd.xlane.f32.xlu0 %v473
    %v475 = vpop.xlane.xlu0 %474
    %v476 = vadd.f32 %v385, %v386
    %v477 = vadd.f32 %v476, %v387
    %478 = vadd.xlane.f32.xlu0 %v477
    %v479 = vpop.xlane.xlu0 %478
    %v480 = vadd.f32 %v388, %v389
    %v481 = vadd.f32 %v480, %v390
    %482 = vadd.xlane.f32.xlu0 %v481
    %v483 = vpop.xlane.xlu0 %482
    %v484 = vadd.f32 %v391, %v392
    %v485 = vadd.f32 %v484, %v393
    %486 = vadd.xlane.f32.xlu0 %v485
    %v487 = vpop.xlane.xlu0 %486
    %v488 = vadd.f32 %v394, %v395
    %v489 = vadd.f32 %v488, %v396
    %490 = vadd.xlane.f32.xlu0 %v489
    %v491 = vpop.xlane.xlu0 %490
    %v492 = vadd.f32 %v397, %v398
    %v493 = vadd.f32 %v492, %v399
    %494 = vadd.xlane.f32.xlu0 %v493
    %v495 = vpop.xlane.xlu0 %494
    %v496 = vadd.f32 %v400, %v401
    %v497 = vadd.f32 %v496, %v402
    %498 = vadd.xlane.f32.xlu0 %v497
    %v499 = vpop.xlane.xlu0 %498
    %v500 = vadd.f32 %v403, %v404
    %v501 = vadd.f32 %v500, %v405
    %502 = vadd.xlane.f32.xlu0 %v501
    %v503 = vpop.xlane.xlu0 %502
    %v504 = vadd.f32 %v406, %v407
    %v505 = vadd.f32 %v504, %v408
    %506 = vadd.xlane.f32.xlu0 %v505
    %v507 = vpop.xlane.xlu0 %506
    %v508 = vsel %vm229, %v409, 0.0
    %v509 = vsel %vm229, %v410, 0.0
    %v510 = vadd.f32 %v508, %v509
    %v511 = vsel %vm229, %v411, 0.0
    %v512 = vadd.f32 %v510, %v511
    %513 = vadd.xlane.f32.xlu0 %v512
    %v514 = vpop.xlane.xlu0 %513
    %v515 = vmul.f32 %v415, 0.0026041667
    %v516 = vmul.f32 %v419, 0.0026041667
    %v517 = vmul.f32 %v423, 0.0026041667
    %v518 = vmul.f32 %v427, 0.0026041667
    %v519 = vmul.f32 %v431, 0.0026041667
    %v520 = vmul.f32 %v435, 0.0026041667
    %v521 = vmul.f32 %v439, 0.0026041667
    %v522 = vmul.f32 %v443, 0.0026041667
    %v523 = vmul.f32 %v447, 0.0026041667
    %v524 = vmul.f32 %v451, 0.0026041667
    %v525 = vmul.f32 %v455, 0.0026041667
    %v526 = vmul.f32 %v459, 0.0026041667
    %v527 = vmul.f32 %v463, 0.0026041667
    %v528 = vmul.f32 %v467, 0.0026041667
    %v529 = vmul.f32 %v471, 0.0026041667
    %v530 = vmul.f32 %v475, 0.0026041667
    %v531 = vmul.f32 %v479, 0.0026041667
    %v532 = vmul.f32 %v483, 0.0026041667
    %v533 = vmul.f32 %v487, 0.0026041667
    %v534 = vmul.f32 %v491, 0.0026041667
    %v535 = vmul.f32 %v495, 0.0026041667
    %v536 = vmul.f32 %v499, 0.0026041667
    %v537 = vmul.f32 %v503, 0.0026041667
    %v538 = vmul.f32 %v507, 0.0026041667
    %v539 = vmul.f32 %v514, 0.0026041667
    %v540 = vadd.f32 %v515, 1e-06
    %v541 = vadd.f32 %v516, 1e-06
    %v542 = vadd.f32 %v517, 1e-06
    %v543 = vadd.f32 %v518, 1e-06
    %v544 = vadd.f32 %v519, 1e-06
    %v545 = vadd.f32 %v520, 1e-06
    %v546 = vadd.f32 %v521, 1e-06
    %v547 = vadd.f32 %v522, 1e-06
    %v548 = vadd.f32 %v523, 1e-06
    %v549 = vadd.f32 %v524, 1e-06
    %v550 = vadd.f32 %v525, 1e-06
    %v551 = vadd.f32 %v526, 1e-06
    %v552 = vadd.f32 %v527, 1e-06
    %v553 = vadd.f32 %v528, 1e-06
    %v554 = vadd.f32 %v529, 1e-06
    %v555 = vadd.f32 %v530, 1e-06
    %v556 = vadd.f32 %v531, 1e-06
    %v557 = vadd.f32 %v532, 1e-06
    %v558 = vadd.f32 %v533, 1e-06
    %v559 = vadd.f32 %v534, 1e-06
    %v560 = vadd.f32 %v535, 1e-06
    %v561 = vadd.f32 %v536, 1e-06
    %v562 = vadd.f32 %v537, 1e-06
    %v563 = vadd.f32 %v538, 1e-06
    %v564 = vadd.f32 %v539, 1e-06
    %v565 = vrsqrt.pop %v540
    %v566 = vmul.f32 %v565, %v540
    %v567 = vmul.f32 %v566, %v565
    %v568 = vmul.f32 0.5, %v567
    %v569 = vsub.f32 1.5, %v568
    %v570 = vmul.f32 %v565, %v569
    %vm571 = vweird.f32 %v540
    %vm572 = vweird.f32 %v565
    %vm573 = vmor %vm571, %vm572
    %v574 = vsel %vm573, %v565, %v570
    %v575 = vrsqrt.pop %v541
    %v576 = vmul.f32 %v575, %v541
    %v577 = vmul.f32 %v576, %v575
    %v578 = vmul.f32 0.5, %v577
    %v579 = vsub.f32 1.5, %v578
    %v580 = vmul.f32 %v575, %v579
    %vm581 = vweird.f32 %v541
    %vm582 = vweird.f32 %v575
    %vm583 = vmor %vm581, %vm582
    %v584 = vsel %vm583, %v575, %v580
    %v585 = vrsqrt.pop %v542
    %v586 = vmul.f32 %v585, %v542
    %v587 = vmul.f32 %v586, %v585
    %v588 = vmul.f32 0.5, %v587
    %v589 = vsub.f32 1.5, %v588
    %v590 = vmul.f32 %v585, %v589
    %vm591 = vweird.f32 %v542
    %vm592 = vweird.f32 %v585
    %vm593 = vmor %vm591, %vm592
    %v594 = vsel %vm593, %v585, %v590
    %v595 = vrsqrt.pop %v543
    %v596 = vmul.f32 %v595, %v543
    %v597 = vmul.f32 %v596, %v595
    %v598 = vmul.f32 0.5, %v597
    %v599 = vsub.f32 1.5, %v598
    %v600 = vmul.f32 %v595, %v599
    %vm601 = vweird.f32 %v543
    %vm602 = vweird.f32 %v595
    %vm603 = vmor %vm601, %vm602
    %v604 = vsel %vm603, %v595, %v600
    %v605 = vrsqrt.pop %v544
    %v606 = vmul.f32 %v605, %v544
    %v607 = vmul.f32 %v606, %v605
    %v608 = vmul.f32 0.5, %v607
    %v609 = vsub.f32 1.5, %v608
    %v610 = vmul.f32 %v605, %v609
    %vm611 = vweird.f32 %v544
    %vm612 = vweird.f32 %v605
    %vm613 = vmor %vm611, %vm612
    %v614 = vsel %vm613, %v605, %v610
    %v615 = vrsqrt.pop %v545
    %v616 = vmul.f32 %v615, %v545
    %v617 = vmul.f32 %v616, %v615
    %v618 = vmul.f32 0.5, %v617
    %v619 = vsub.f32 1.5, %v618
    %v620 = vmul.f32 %v615, %v619
    %vm621 = vweird.f32 %v545
    %vm622 = vweird.f32 %v615
    %vm623 = vmor %vm621, %vm622
    %v624 = vsel %vm623, %v615, %v620
    %v625 = vrsqrt.pop %v546
    %v626 = vmul.f32 %v625, %v546
    %v627 = vmul.f32 %v626, %v625
    %v628 = vmul.f32 0.5, %v627
    %v629 = vsub.f32 1.5, %v628
    %v630 = vmul.f32 %v625, %v629
    %vm631 = vweird.f32 %v546
    %vm632 = vweird.f32 %v625
    %vm633 = vmor %vm631, %vm632
    %v634 = vsel %vm633, %v625, %v630
    %v635 = vrsqrt.pop %v547
    %v636 = vmul.f32 %v635, %v547
    %v637 = vmul.f32 %v636, %v635
    %v638 = vmul.f32 0.5, %v637
    %v639 = vsub.f32 1.5, %v638
    %v640 = vmul.f32 %v635, %v639
    %vm641 = vweird.f32 %v547
    %vm642 = vweird.f32 %v635
    %vm643 = vmor %vm641, %vm642
    %v644 = vsel %vm643, %v635, %v640
    %v645 = vrsqrt.pop %v548
    %v646 = vmul.f32 %v645, %v548
    %v647 = vmul.f32 %v646, %v645
    %v648 = vmul.f32 0.5, %v647
    %v649 = vsub.f32 1.5, %v648
    %v650 = vmul.f32 %v645, %v649
    %vm651 = vweird.f32 %v548
    %vm652 = vweird.f32 %v645
    %vm653 = vmor %vm651, %vm652
    %v654 = vsel %vm653, %v645, %v650
    %v655 = vrsqrt.pop %v549
    %v656 = vmul.f32 %v655, %v549
    %v657 = vmul.f32 %v656, %v655
    %v658 = vmul.f32 0.5, %v657
    %v659 = vsub.f32 1.5, %v658
    %v660 = vmul.f32 %v655, %v659
    %vm661 = vweird.f32 %v549
    %vm662 = vweird.f32 %v655
    %vm663 = vmor %vm661, %vm662
    %v664 = vsel %vm663, %v655, %v660
    %v665 = vrsqrt.pop %v550
    %v666 = vmul.f32 %v665, %v550
    %v667 = vmul.f32 %v666, %v665
    %v668 = vmul.f32 0.5, %v667
    %v669 = vsub.f32 1.5, %v668
    %v670 = vmul.f32 %v665, %v669
    %vm671 = vweird.f32 %v550
    %vm672 = vweird.f32 %v665
    %vm673 = vmor %vm671, %vm672
    %v674 = vsel %vm673, %v665, %v670
    %v675 = vrsqrt.pop %v551
    %v676 = vmul.f32 %v675, %v551
    %v677 = vmul.f32 %v676, %v675
    %v678 = vmul.f32 0.5, %v677
    %v679 = vsub.f32 1.5, %v678
    %v680 = vmul.f32 %v675, %v679
    %vm681 = vweird.f32 %v551
    %vm682 = vweird.f32 %v675
    %vm683 = vmor %vm681, %vm682
    %v684 = vsel %vm683, %v675, %v680
    %v685 = vrsqrt.pop %v552
    %v686 = vmul.f32 %v685, %v552
    %v687 = vmul.f32 %v686, %v685
    %v688 = vmul.f32 0.5, %v687
    %v689 = vsub.f32 1.5, %v688
    %v690 = vmul.f32 %v685, %v689
    %vm691 = vweird.f32 %v552
    %vm692 = vweird.f32 %v685
    %vm693 = vmor %vm691, %vm692
    %v694 = vsel %vm693, %v685, %v690
    %v695 = vrsqrt.pop %v553
    %v696 = vmul.f32 %v695, %v553
    %v697 = vmul.f32 %v696, %v695
    %v698 = vmul.f32 0.5, %v697
    %v699 = vsub.f32 1.5, %v698
    %v700 = vmul.f32 %v695, %v699
    %vm701 = vweird.f32 %v553
    %vm702 = vweird.f32 %v695
    %vm703 = vmor %vm701, %vm702
    %v704 = vsel %vm703, %v695, %v700
    %v705 = vrsqrt.pop %v554
    %v706 = vmul.f32 %v705, %v554
    %v707 = vmul.f32 %v706, %v705
    %v708 = vmul.f32 0.5, %v707
    %v709 = vsub.f32 1.5, %v708
    %v710 = vmul.f32 %v705, %v709
    %vm711 = vweird.f32 %v554
    %vm712 = vweird.f32 %v705
    %vm713 = vmor %vm711, %vm712
    %v714 = vsel %vm713, %v705, %v710
    %v715 = vrsqrt.pop %v555
    %v716 = vmul.f32 %v715, %v555
    %v717 = vmul.f32 %v716, %v715
    %v718 = vmul.f32 0.5, %v717
    %v719 = vsub.f32 1.5, %v718
    %v720 = vmul.f32 %v715, %v719
    %vm721 = vweird.f32 %v555
    %vm722 = vweird.f32 %v715
    %vm723 = vmor %vm721, %vm722
    %v724 = vsel %vm723, %v715, %v720
    %v725 = vrsqrt.pop %v556
    %v726 = vmul.f32 %v725, %v556
    %v727 = vmul.f32 %v726, %v725
    %v728 = vmul.f32 0.5, %v727
    %v729 = vsub.f32 1.5, %v728
    %v730 = vmul.f32 %v725, %v729
    %vm731 = vweird.f32 %v556
    %vm732 = vweird.f32 %v725
    %vm733 = vmor %vm731, %vm732
    %v734 = vsel %vm733, %v725, %v730
    %v735 = vrsqrt.pop %v557
    %v736 = vmul.f32 %v735, %v557
    %v737 = vmul.f32 %v736, %v735
    %v738 = vmul.f32 0.5, %v737
    %v739 = vsub.f32 1.5, %v738
    %v740 = vmul.f32 %v735, %v739
    %vm741 = vweird.f32 %v557
    %vm742 = vweird.f32 %v735
    %vm743 = vmor %vm741, %vm742
    %v744 = vsel %vm743, %v735, %v740
    %v745 = vrsqrt.pop %v558
    %v746 = vmul.f32 %v745, %v558
    %v747 = vmul.f32 %v746, %v745
    %v748 = vmul.f32 0.5, %v747
    %v749 = vsub.f32 1.5, %v748
    %v750 = vmul.f32 %v745, %v749
    %vm751 = vweird.f32 %v558
    %vm752 = vweird.f32 %v745
    %vm753 = vmor %vm751, %vm752
    %v754 = vsel %vm753, %v745, %v750
    %v755 = vrsqrt.pop %v559
    %v756 = vmul.f32 %v755, %v559
    %v757 = vmul.f32 %v756, %v755
    %v758 = vmul.f32 0.5, %v757
    %v759 = vsub.f32 1.5, %v758
    %v760 = vmul.f32 %v755, %v759
    %vm761 = vweird.f32 %v559
    %vm762 = vweird.f32 %v755
    %vm763 = vmor %vm761, %vm762
    %v764 = vsel %vm763, %v755, %v760
    %v765 = vrsqrt.pop %v560
    %v766 = vmul.f32 %v765, %v560
    %v767 = vmul.f32 %v766, %v765
    %v768 = vmul.f32 0.5, %v767
    %v769 = vsub.f32 1.5, %v768
    %v770 = vmul.f32 %v765, %v769
    %vm771 = vweird.f32 %v560
    %vm772 = vweird.f32 %v765
    %vm773 = vmor %vm771, %vm772
    %v774 = vsel %vm773, %v765, %v770
    %v775 = vrsqrt.pop %v561
    %v776 = vmul.f32 %v775, %v561
    %v777 = vmul.f32 %v776, %v775
    %v778 = vmul.f32 0.5, %v777
    %v779 = vsub.f32 1.5, %v778
    %v780 = vmul.f32 %v775, %v779
    %vm781 = vweird.f32 %v561
    %vm782 = vweird.f32 %v775
    %vm783 = vmor %vm781, %vm782
    %v784 = vsel %vm783, %v775, %v780
    %v785 = vrsqrt.pop %v562
    %v786 = vmul.f32 %v785, %v562
    %v787 = vmul.f32 %v786, %v785
    %v788 = vmul.f32 0.5, %v787
    %v789 = vsub.f32 1.5, %v788
    %v790 = vmul.f32 %v785, %v789
    %vm791 = vweird.f32 %v562
    %vm792 = vweird.f32 %v785
    %vm793 = vmor %vm791, %vm792
    %v794 = vsel %vm793, %v785, %v790
    %v795 = vrsqrt.pop %v563
    %v796 = vmul.f32 %v795, %v563
    %v797 = vmul.f32 %v796, %v795
    %v798 = vmul.f32 0.5, %v797
    %v799 = vsub.f32 1.5, %v798
    %v800 = vmul.f32 %v795, %v799
    %vm801 = vweird.f32 %v563
    %vm802 = vweird.f32 %v795
    %vm803 = vmor %vm801, %vm802
    %v804 = vsel %vm803, %v795, %v800
    %v805 = vrsqrt.pop %v564
    %v806 = vmul.f32 %v805, %v564
    %v807 = vmul.f32 %v806, %v805
    %v808 = vmul.f32 0.5, %v807
    %v809 = vsub.f32 1.5, %v808
    %v810 = vmul.f32 %v805, %v809
    %vm811 = vweird.f32 %v564
    %vm812 = vweird.f32 %v805
    %vm813 = vmor %vm811, %vm812
    %v814 = vsel %vm813, %v805, %v810
    %v815 = vld [vmem:[#allocation5] sm:$0x7]
    %v816 = vld [vmem:[#allocation7] sm:$0x7]
    %v818 = vperm.slane %v815, 0
    %v819 = vperm.slane %v815, 1
    %v820 = vperm.slane %v815, 2
    %v824 = vmul.f32 %v574, %v818
    %v825 = vmul.f32 %v574, %v819
    %v826 = vmul.f32 %v574, %v820
    %v827 = vmul.f32 %v584, %v818
    %v828 = vmul.f32 %v584, %v819
    %v829 = vmul.f32 %v584, %v820
    %v830 = vmul.f32 %v594, %v818
    %v831 = vmul.f32 %v594, %v819
    %v832 = vmul.f32 %v594, %v820
    %v833 = vmul.f32 %v604, %v818
    %v834 = vmul.f32 %v604, %v819
    %v835 = vmul.f32 %v604, %v820
    %v836 = vmul.f32 %v614, %v818
    %v837 = vmul.f32 %v614, %v819
    %v838 = vmul.f32 %v614, %v820
    %v839 = vmul.f32 %v624, %v818
    %v840 = vmul.f32 %v624, %v819
    %v841 = vmul.f32 %v624, %v820
    %v842 = vmul.f32 %v634, %v818
    %v843 = vmul.f32 %v634, %v819
    %v844 = vmul.f32 %v634, %v820
    %v845 = vmul.f32 %v644, %v818
    %v846 = vmul.f32 %v644, %v819
    %v847 = vmul.f32 %v644, %v820
    %v848 = vmul.f32 %v654, %v818
    %v849 = vmul.f32 %v654, %v819
    %v850 = vmul.f32 %v654, %v820
    %v851 = vmul.f32 %v664, %v818
    %v852 = vmul.f32 %v664, %v819
    %v853 = vmul.f32 %v664, %v820
    %v854 = vmul.f32 %v674, %v818
    %v855 = vmul.f32 %v674, %v819
    %v856 = vmul.f32 %v674, %v820
    %v857 = vmul.f32 %v684, %v818
    %v858 = vmul.f32 %v684, %v819
    %v859 = vmul.f32 %v684, %v820
    %v860 = vmul.f32 %v694, %v818
    %v861 = vmul.f32 %v694, %v819
    %v862 = vmul.f32 %v694, %v820
    %v863 = vmul.f32 %v704, %v818
    %v864 = vmul.f32 %v704, %v819
    %v865 = vmul.f32 %v704, %v820
    %v866 = vmul.f32 %v714, %v818
    %v867 = vmul.f32 %v714, %v819
    %v868 = vmul.f32 %v714, %v820
    %v869 = vmul.f32 %v724, %v818
    %v870 = vmul.f32 %v724, %v819
    %v871 = vmul.f32 %v724, %v820
    %v872 = vmul.f32 %v734, %v818
    %v873 = vmul.f32 %v734, %v819
    %v874 = vmul.f32 %v734, %v820
    %v875 = vmul.f32 %v744, %v818
    %v876 = vmul.f32 %v744, %v819
    %v877 = vmul.f32 %v744, %v820
    %v878 = vmul.f32 %v754, %v818
    %v879 = vmul.f32 %v754, %v819
    %v880 = vmul.f32 %v754, %v820
    %v881 = vmul.f32 %v764, %v818
    %v882 = vmul.f32 %v764, %v819
    %v883 = vmul.f32 %v764, %v820
    %v884 = vmul.f32 %v774, %v818
    %v885 = vmul.f32 %v774, %v819
    %v886 = vmul.f32 %v774, %v820
    %v887 = vmul.f32 %v784, %v818
    %v888 = vmul.f32 %v784, %v819
    %v889 = vmul.f32 %v784, %v820
    %v890 = vmul.f32 %v794, %v818
    %v891 = vmul.f32 %v794, %v819
    %v892 = vmul.f32 %v794, %v820
    %v893 = vmul.f32 %v804, %v818
    %v894 = vmul.f32 %v804, %v819
    %v895 = vmul.f32 %v804, %v820
    %v896 = vmul.f32 %v814, %v818
    %v897 = vmul.f32 %v814, %v819
    %v898 = vmul.f32 %v814, %v820
    %v899 = vmul.f32 %v262, %v824
    %v900 = vmul.f32 %v263, %v825
    %v901 = vmul.f32 %v264, %v826
    %v902 = vmul.f32 %v265, %v827
    %v903 = vmul.f32 %v266, %v828
    %v904 = vmul.f32 %v267, %v829
    %v905 = vmul.f32 %v268, %v830
    %v906 = vmul.f32 %v269, %v831
    %v907 = vmul.f32 %v270, %v832
    %v908 = vmul.f32 %v271, %v833
    %v909 = vmul.f32 %v272, %v834
    %v910 = vmul.f32 %v273, %v835
    %v911 = vmul.f32 %v274, %v836
    %v912 = vmul.f32 %v275, %v837
    %v913 = vmul.f32 %v276, %v838
    %v914 = vmul.f32 %v277, %v839
    %v915 = vmul.f32 %v278, %v840
    %v916 = vmul.f32 %v279, %v841
    %v917 = vmul.f32 %v280, %v842
    %v918 = vmul.f32 %v281, %v843
    %v919 = vmul.f32 %v282, %v844
    %v920 = vmul.f32 %v283, %v845
    %v921 = vmul.f32 %v284, %v846
    %v922 = vmul.f32 %v285, %v847
    %v923 = vmul.f32 %v286, %v848
    %v924 = vmul.f32 %v287, %v849
    %v925 = vmul.f32 %v288, %v850
    %v926 = vmul.f32 %v289, %v851
    %v927 = vmul.f32 %v290, %v852
    %v928 = vmul.f32 %v291, %v853
    %v929 = vmul.f32 %v292, %v854
    %v930 = vmul.f32 %v293, %v855
    %v931 = vmul.f32 %v294, %v856
    %v932 = vmul.f32 %v295, %v857
    %v933 = vmul.f32 %v296, %v858
    %v934 = vmul.f32 %v297, %v859
    %v935 = vmul.f32 %v298, %v860
    %v936 = vmul.f32 %v299, %v861
    %v937 = vmul.f32 %v300, %v862
    %v938 = vmul.f32 %v301, %v863
    %v939 = vmul.f32 %v302, %v864
    %v940 = vmul.f32 %v303, %v865
    %v941 = vmul.f32 %v304, %v866
    %v942 = vmul.f32 %v305, %v867
    %v943 = vmul.f32 %v306, %v868
    %v944 = vmul.f32 %v307, %v869
    %v945 = vmul.f32 %v308, %v870
    %v946 = vmul.f32 %v309, %v871
    %v947 = vmul.f32 %v310, %v872
    %v948 = vmul.f32 %v311, %v873
    %v949 = vmul.f32 %v312, %v874
    %v950 = vmul.f32 %v313, %v875
    %v951 = vmul.f32 %v314, %v876
    %v952 = vmul.f32 %v315, %v877
    %v953 = vmul.f32 %v316, %v878
    %v954 = vmul.f32 %v317, %v879
    %v955 = vmul.f32 %v318, %v880
    %v956 = vmul.f32 %v319, %v881
    %v957 = vmul.f32 %v320, %v882
    %v958 = vmul.f32 %v321, %v883
    %v959 = vmul.f32 %v322, %v884
    %v960 = vmul.f32 %v323, %v885
    %v961 = vmul.f32 %v324, %v886
    %v962 = vmul.f32 %v325, %v887
    %v963 = vmul.f32 %v326, %v888
    %v964 = vmul.f32 %v327, %v889
    %v965 = vmul.f32 %v328, %v890
    %v966 = vmul.f32 %v329, %v891
    %v967 = vmul.f32 %v330, %v892
    %v968 = vmul.f32 %v331, %v893
    %v969 = vmul.f32 %v332, %v894
    %v970 = vmul.f32 %v333, %v895
    %v971 = vmul.f32 %v334, %v896
    %v972 = vmul.f32 %v335, %v897
    %v973 = vmul.f32 %v336, %v898
    %v975 = vperm.slane %v816, 0
    %v976 = vperm.slane %v816, 1
    %v977 = vperm.slane %v816, 2
    %v981 = vadd.f32 %v899, %v975
    %v982 = vadd.f32 %v900, %v976
    %v983 = vadd.f32 %v901, %v977
    %v984 = vadd.f32 %v902, %v975
    %v985 = vadd.f32 %v903, %v976
    %v986 = vadd.f32 %v904, %v977
    %v987 = vadd.f32 %v905, %v975
    %v988 = vadd.f32 %v906, %v976
    %v989 = vadd.f32 %v907, %v977
    %v990 = vadd.f32 %v908, %v975
    %v991 = vadd.f32 %v909, %v976
    %v992 = vadd.f32 %v910, %v977
    %v993 = vadd.f32 %v911, %v975
    %v994 = vadd.f32 %v912, %v976
    %v995 = vadd.f32 %v913, %v977
    %v996 = vadd.f32 %v914, %v975
    %v997 = vadd.f32 %v915, %v976
    %v998 = vadd.f32 %v916, %v977
    %v999 = vadd.f32 %v917, %v975
    %v1000 = vadd.f32 %v918, %v976
    %v1001 = vadd.f32 %v919, %v977
    %v1002 = vadd.f32 %v920, %v975
    %v1003 = vadd.f32 %v921, %v976
    %v1004 = vadd.f32 %v922, %v977
    %v1005 = vadd.f32 %v923, %v975
    %v1006 = vadd.f32 %v924, %v976
    %v1007 = vadd.f32 %v925, %v977
    %v1008 = vadd.f32 %v926, %v975
    %v1009 = vadd.f32 %v927, %v976
    %v1010 = vadd.f32 %v928, %v977
    %v1011 = vadd.f32 %v929, %v975
    %v1012 = vadd.f32 %v930, %v976
    %v1013 = vadd.f32 %v931, %v977
    %v1014 = vadd.f32 %v932, %v975
    %v1015 = vadd.f32 %v933, %v976
    %v1016 = vadd.f32 %v934, %v977
    %v1017 = vadd.f32 %v935, %v975
    %v1018 = vadd.f32 %v936, %v976
    %v1019 = vadd.f32 %v937, %v977
    %v1020 = vadd.f32 %v938, %v975
    %v1021 = vadd.f32 %v939, %v976
    %v1022 = vadd.f32 %v940, %v977
    %v1023 = vadd.f32 %v941, %v975
    %v1024 = vadd.f32 %v942, %v976
    %v1025 = vadd.f32 %v943, %v977
    %v1026 = vadd.f32 %v944, %v975
    %v1027 = vadd.f32 %v945, %v976
    %v1028 = vadd.f32 %v946, %v977
    %v1029 = vadd.f32 %v947, %v975
    %v1030 = vadd.f32 %v948, %v976
    %v1031 = vadd.f32 %v949, %v977
    %v1032 = vadd.f32 %v950, %v975
    %v1033 = vadd.f32 %v951, %v976
    %v1034 = vadd.f32 %v952, %v977
    %v1035 = vadd.f32 %v953, %v975
    %v1036 = vadd.f32 %v954, %v976
    %v1037 = vadd.f32 %v955, %v977
    %v1038 = vadd.f32 %v956, %v975
    %v1039 = vadd.f32 %v957, %v976
    %v1040 = vadd.f32 %v958, %v977
    %v1041 = vadd.f32 %v959, %v975
    %v1042 = vadd.f32 %v960, %v976
    %v1043 = vadd.f32 %v961, %v977
    %v1044 = vadd.f32 %v962, %v975
    %v1045 = vadd.f32 %v963, %v976
    %v1046 = vadd.f32 %v964, %v977
    %v1047 = vadd.f32 %v965, %v975
    %v1048 = vadd.f32 %v966, %v976
    %v1049 = vadd.f32 %v967, %v977
    %v1050 = vadd.f32 %v968, %v975
    %v1051 = vadd.f32 %v969, %v976
    %v1052 = vadd.f32 %v970, %v977
    %v1053 = vadd.f32 %v971, %v975
    %v1054 = vadd.f32 %v972, %v976
    %v1055 = vadd.f32 %v973, %v977
    %1056 = vst [vmem:[#allocation8] sm:$0xff] %v981
    %1057 = vst [vmem:[#allocation8 + $0x8] sm:$0xff] %v982
    %1058 = vst [vmem:[#allocation8 + $0x10] sm:$0xff] %v983
    %1059 = vst [vmem:[#allocation8 + $0x18] sm:$0xff] %v984
    %1060 = vst [vmem:[#allocation8 + $0x20] sm:$0xff] %v985
    %1061 = vst [vmem:[#allocation8 + $0x28] sm:$0xff] %v986
    %1062 = vst [vmem:[#allocation8 + $0x30] sm:$0xff] %v987
    %1063 = vst [vmem:[#allocation8 + $0x38] sm:$0xff] %v988
    %1064 = vst [vmem:[#allocation8 + $0x40] sm:$0xff] %v989
    %1065 = vst [vmem:[#allocation8 + $0x48] sm:$0xff] %v990
    %1066 = vst [vmem:[#allocation8 + $0x50] sm:$0xff] %v991
    %1067 = vst [vmem:[#allocation8 + $0x58] sm:$0xff] %v992
    %1068 = vst [vmem:[#allocation8 + $0x60] sm:$0xff] %v993
    %1069 = vst [vmem:[#allocation8 + $0x68] sm:$0xff] %v994
    %1070 = vst [vmem:[#allocation8 + $0x70] sm:$0xff] %v995
    %1071 = vst [vmem:[#allocation8 + $0x78] sm:$0xff] %v996
    %1072 = vst [vmem:[#allocation8 + $0x80] sm:$0xff] %v997
    %1073 = vst [vmem:[#allocation8 + $0x88] sm:$0xff] %v998
    %1074 = vst [vmem:[#allocation8 + $0x90] sm:$0xff] %v999
    %1075 = vst [vmem:[#allocation8 + $0x98] sm:$0xff] %v1000
    %1076 = vst [vmem:[#allocation8 + $0xa0] sm:$0xff] %v1001
    %1077 = vst [vmem:[#allocation8 + $0xa8] sm:$0xff] %v1002
    %1078 = vst [vmem:[#allocation8 + $0xb0] sm:$0xff] %v1003
    %1079 = vst [vmem:[#allocation8 + $0xb8] sm:$0xff] %v1004
    %1080 = vst [vmem:[#allocation8 + $0xc0] sm:$0xff] %v1005
    %1081 = vst [vmem:[#allocation8 + $0xc8] sm:$0xff] %v1006
    %1082 = vst [vmem:[#allocation8 + $0xd0] sm:$0xff] %v1007
    %1083 = vst [vmem:[#allocation8 + $0xd8] sm:$0xff] %v1008
    %1084 = vst [vmem:[#allocation8 + $0xe0] sm:$0xff] %v1009
    %1085 = vst [vmem:[#allocation8 + $0xe8] sm:$0xff] %v1010
    %1086 = vst [vmem:[#allocation8 + $0xf0] sm:$0xff] %v1011
    %1087 = vst [vmem:[#allocation8 + $0xf8] sm:$0xff] %v1012
    %1088 = vst [vmem:[#allocation8 + $0x100] sm:$0xff] %v1013
    %1089 = vst [vmem:[#allocation8 + $0x108] sm:$0xff] %v1014
    %1090 = vst [vmem:[#allocation8 + $0x110] sm:$0xff] %v1015
    %1091 = vst [vmem:[#allocation8 + $0x118] sm:$0xff] %v1016
    %1092 = vst [vmem:[#allocation8 + $0x120] sm:$0xff] %v1017
    %1093 = vst [vmem:[#allocation8 + $0x128] sm:$0xff] %v1018
    %1094 = vst [vmem:[#allocation8 + $0x130] sm:$0xff] %v1019
    %1095 = vst [vmem:[#allocation8 + $0x138] sm:$0xff] %v1020
    %1096 = vst [vmem:[#allocation8 + $0x140] sm:$0xff] %v1021
    %1097 = vst [vmem:[#allocation8 + $0x148] sm:$0xff] %v1022
    %1098 = vst [vmem:[#allocation8 + $0x150] sm:$0xff] %v1023
    %1099 = vst [vmem:[#allocation8 + $0x158] sm:$0xff] %v1024
    %1100 = vst [vmem:[#allocation8 + $0x160] sm:$0xff] %v1025
    %1101 = vst [vmem:[#allocation8 + $0x168] sm:$0xff] %v1026
    %1102 = vst [vmem:[#allocation8 + $0x170] sm:$0xff] %v1027
    %1103 = vst [vmem:[#allocation8 + $0x178] sm:$0xff] %v1028
    %1104 = vst [vmem:[#allocation8 + $0x180] sm:$0xff] %v1029
    %1105 = vst [vmem:[#allocation8 + $0x188] sm:$0xff] %v1030
    %1106 = vst [vmem:[#allocation8 + $0x190] sm:$0xff] %v1031
    %1107 = vst [vmem:[#allocation8 + $0x198] sm:$0xff] %v1032
    %1108 = vst [vmem:[#allocation8 + $0x1a0] sm:$0xff] %v1033
    %1109 = vst [vmem:[#allocation8 + $0x1a8] sm:$0xff] %v1034
    %1110 = vst [vmem:[#allocation8 + $0x1b0] sm:$0xff] %v1035
    %1111 = vst [vmem:[#allocation8 + $0x1b8] sm:$0xff] %v1036
    %1112 = vst [vmem:[#allocation8 + $0x1c0] sm:$0xff] %v1037
    %1113 = vst [vmem:[#allocation8 + $0x1c8] sm:$0xff] %v1038
    %1114 = vst [vmem:[#allocation8 + $0x1d0] sm:$0xff] %v1039
    %1115 = vst [vmem:[#allocation8 + $0x1d8] sm:$0xff] %v1040
    %1116 = vst [vmem:[#allocation8 + $0x1e0] sm:$0xff] %v1041
    %1117 = vst [vmem:[#allocation8 + $0x1e8] sm:$0xff] %v1042
    %1118 = vst [vmem:[#allocation8 + $0x1f0] sm:$0xff] %v1043
    %1119 = vst [vmem:[#allocation8 + $0x1f8] sm:$0xff] %v1044
    %1120 = vst [vmem:[#allocation8 + $0x200] sm:$0xff] %v1045
    %1121 = vst [vmem:[#allocation8 + $0x208] sm:$0xff] %v1046
    %1122 = vst [vmem:[#allocation8 + $0x210] sm:$0xff] %v1047
    %1123 = vst [vmem:[#allocation8 + $0x218] sm:$0xff] %v1048
    %1124 = vst [vmem:[#allocation8 + $0x220] sm:$0xff] %v1049
    %1125 = vst [vmem:[#allocation8 + $0x228] sm:$0xff] %v1050
    %1126 = vst [vmem:[#allocation8 + $0x230] sm:$0xff] %v1051
    %1127 = vst [vmem:[#allocation8 + $0x238] sm:$0xff] %v1052
    %1128 = vst [vmem:[#allocation8 + $0x240] sm:$0xf] %v1053
    %1129 = vst [vmem:[#allocation8 + $0x248] sm:$0xf] %v1054
    %1130 = vst [vmem:[#allocation8 + $0x250] sm:$0xf] %v1055
    // Predicated region
    $region26: #{tpu_custom_call.1} parent=1 // pred_check
      _
    $region27: #{tpu_custom_call.1} parent=1 // pred_check_branch
      %1132 = sbr.rel (0) target = $region29
    $region28: #{tpu_custom_call.1} parent=1 // pred_region
      %1134 = vsyncadd [#allocation4], 0
      %s1135 = sshll.u32 [#allocation8], 4
      %s1136 = int_to_ptr.vmem [resolvable:$true] %s1135
      %s1137 = sshll.u32 %s3, 4
      %s1138 = int_to_ptr.hbm [resolvable:$true] %s1137
      %1143 = dma.vmem_to_hbm [thread:$0]  %s1136, 9600, %s1138, [#allocation4], 384, 384, 24
    $region29: #{tpu_custom_call.1} parent=1 // pred_fallthru
      _
    // Predicated region
    $region30: #{tpu_custom_call.1} parent=1 // pred_check
      _
    $region31: #{tpu_custom_call.1} parent=1 // pred_check_branch
      %1145 = sbr.rel (0) target = $region33
    $region32: #{tpu_custom_call.1} parent=1 // pred_region
      %1147 = dma.done [#allocation4], 9600
    $region33: #{tpu_custom_call.1} parent=1 // pred_fallthru
      _
    %1148 = vsyncpa [#allocation3], 1
    %1149 = vsyncpa [#allocation6], 1
    %1150 = vsyncpa [#allocation4], 1

</llo_original>
